<compile_context>
chip_gen: v5e
topology: v5e:2x2
jax: 0.10.0
libtpu: 0.0.40
codegen_flags: <defaults>
</compile_context>

<pallas_src>
import functools
import math

import jax
import jax.numpy as jnp
from jax.experimental import pallas as pl
from jax.experimental.pallas import tpu as pltpu


def _rmsnorm_kernel(x_ref, w_ref, o_ref, *, eps):
    # x_ref: (tile_rows, hidden), w_ref: (1, hidden) already in output dtype,
    # o_ref: (tile_rows, hidden).
    #
    # NOTE on masked tails: the grid uses pl.cdiv, so the last tile may contain
    # padded / stale rows.  That is safe ONLY because the reduction below is
    # strictly per-row over the full `hidden` (lane) axis — garbage rows
    # produce garbage that is never written back to HBM.  Do not add any
    # cross-row statistics (e.g. fused residual stats) without revisiting this.
    x_in = x_ref[...]
    x = x_in.astype(jnp.float32)                       # hidden_states.to(float32)
    var = jnp.mean(x * x, axis=-1, keepdims=True)      # pow(2).mean(-1, keepdim=True)
    inv = jax.lax.rsqrt(var + eps)                     # rsqrt(variance + eps)  (EUP slot)
    normed = (x * inv).astype(x_in.dtype)              # .to(input_dtype)  (HF rounding)
    # weight (already promoted dtype) * normed -> promoted dtype, same as PyTorch.
    o_ref[...] = (w_ref[...] * normed).astype(o_ref.dtype)


def _sublane_pack(dtype):
    # Rows per sublane group: 8 for 32-bit, 16 for 16-bit, 32 for 8-bit dtypes.
    itemsize = jnp.dtype(dtype).itemsize
    return max(8, 32 // itemsize)


def _vmem_capacity_bytes():
    try:
        return int(pltpu.get_tpu_info().vmem_capacity_bytes)
    except Exception:
        # Conservative fallback: v7x per-TensorCore capacity.
        return 64 * 1024 * 1024


def _num_tensorcores_per_chip():
    # v7x has 2 TensorCores per chip; v5e/v6e have 1.  device_kind is a stable
    # public attribute, so prefer it over guessing TpuInfo field names.
    try:
        kind = jax.devices()[0].device_kind.lower()
    except Exception:
        return 1
    return 2 if "v7" in kind else 1


_TARGET_TILE_BYTES = 8 << 20    # ~8 MiB of *input* per grid step (4-16 MiB band)
_MAX_BUFFER_BYTES = 40 << 20    # hard cap on all double-buffered tiles (v7x headroom)


def _pick_tile_rows(rows, hidden, in_dtype, out_dtype, requested, num_cores):
    pack = _sublane_pack(in_dtype)
    in_isz = jnp.dtype(in_dtype).itemsize
    out_isz = jnp.dtype(out_dtype).itemsize
    rows_padded = ((rows + pack - 1) // pack) * pack

    if requested is not None:
        tile = max(pack, (int(requested) // pack) * pack)
        return min(tile, rows_padded)

    # Rows giving ~_TARGET_TILE_BYTES of input per step: keeps every grid step
    # at several microseconds of DMA even when `hidden` is small (128-512).
    rows_by_target = max(pack, _TARGET_TILE_BYTES // (hidden * in_isz))

    # Keep the double-buffered (in + out) tiles inside a trimmed VMEM budget:
    # <= 40 MiB, and never more than half the per-core capacity (v7x: 64 MiB/TC).
    buf_budget = min(_MAX_BUFFER_BYTES, _vmem_capacity_bytes() // 2)
    bytes_per_row = 2 * hidden * (in_isz + out_isz)     # x2 for double buffering
    rows_by_vmem = max(pack, buf_budget // bytes_per_row)

    tile = min(rows_by_target, rows_by_vmem, rows_padded)
    tile = max(pack, (tile // pack) * pack)

    if num_cores > 1 and rows_padded >= 2 * pack:
        # Both TensorCores share HBM: make sure this bandwidth-bound grid has
        # enough steps for a balanced per-core split (target >= 8 when rows
        # allow).  Single-TC chips skip this: extra steps are pure overhead.
        max_steps = rows_padded // pack
        target_steps = min(8, max_steps)
        if pl.cdiv(rows_padded, tile) < target_steps:
            tile = max(pack, (rows_padded // target_steps) // pack * pack)

    return tile


def rmsnorm(x, weight, eps=1e-6, tile_rows=None,
            downcast_weight_to_input_dtype=False):
    """Matches DeepseekV3RMSNorm.forward. x: (..., hidden), weight: (hidden,).

    downcast_weight_to_input_dtype: opt-in semantics change — cast an f32
    weight down to x.dtype so the output (and HBM write traffic) stays at the
    activation width instead of being promoted to f32.  Default (False) keeps
    exact HF promotion semantics of `weight * hidden_states.to(input_dtype)`.
    """
    hidden = x.shape[-1]
    lead_shape = x.shape[:-1]
    rows = math.prod(lead_shape) if lead_shape else 1

    if downcast_weight_to_input_dtype:
        weight = weight.astype(x.dtype)
    out_dtype = jnp.promote_types(weight.dtype, x.dtype)

    x2d = x.reshape(rows, hidden)
    # Pre-cast the weight once in the wrapper (no per-grid-step cast in kernel).
    w2d = weight.astype(out_dtype).reshape(1, hidden)

    num_cores = _num_tensorcores_per_chip()
    tile = _pick_tile_rows(rows, hidden, x.dtype, out_dtype, tile_rows, num_cores)
    grid = (pl.cdiv(rows, tile),)

    # VMEM footprint: double-buffered input + output tiles plus the weight row.
    in_isz = jnp.dtype(x.dtype).itemsize
    out_isz = jnp.dtype(out_dtype).itemsize
    footprint = 2 * tile * hidden * (in_isz + out_isz) + hidden * out_isz
    capacity = _vmem_capacity_bytes()
    vmem_limit = max(32 << 20, min(capacity * 3 // 4, footprint + (8 << 20)))

    def _run(dim_semantics):
        return pl.pallas_call(
            functools.partial(_rmsnorm_kernel, eps=eps),
            out_shape=jax.ShapeDtypeStruct((rows, hidden), out_dtype),
            grid_spec=pltpu.PrefetchScalarGridSpec(
                num_scalar_prefetch=0,
                grid=grid,
                in_specs=[
                    pl.BlockSpec((tile, hidden), lambda i: (i, 0)),
                    pl.BlockSpec((1, hidden), lambda i: (0, 0)),
                ],
                # Default double buffering kept on purpose: bandwidth-bound,
                # deeper pl.Buffered() would only burn VMEM.
                out_specs=pl.BlockSpec((tile, hidden), lambda i: (i, 0)),
            ),
            compiler_params=pltpu.CompilerParams(
                dimension_semantics=dim_semantics,
                vmem_limit_bytes=vmem_limit,
            ),
        )(x2d, w2d)

    if num_cores > 1 and grid[0] > 1:
        # v7x: request an explicit per-core split of the row axis; fall back to
        # plain "parallel" if this chip/toolchain rejects CORE_PARALLEL.
        try:
            out2d = _run((pltpu.CORE_PARALLEL,))
        except Exception:
            out2d = _run(("parallel",))
    else:
        out2d = _run(("parallel",))

    return out2d.reshape(*lead_shape, hidden)


def _reference(x, weight, eps):
    xf = x.astype(jnp.float32)
    var = jnp.mean(xf * xf, axis=-1, keepdims=True)
    normed = (xf * jax.lax.rsqrt(var + eps)).astype(x.dtype)
    return weight * normed


if __name__ == "__main__":
    key = jax.random.PRNGKey(0)

    # --- Test 1: small f32 case (module-default shapes) ---
    batch, seq, hidden = 2, 8, 32
    x = jax.random.normal(key, (batch, seq, hidden), dtype=jnp.float32)
    # Deterministic non-trivial weight (module init is ones) so the scale path
    # is actually exercised.
    weight = 1.0 + 0.01 * jnp.arange(hidden, dtype=jnp.float32)

    out = jax.block_until_ready(rmsnorm(x, weight, eps=1e-6))
    ref = _reference(x, weight, 1e-6)
    assert out.shape == ref.shape and out.dtype == ref.dtype
    assert jnp.allclose(out, ref, atol=1e-5, rtol=1e-5)

    # --- Test 2: bf16 activations + bf16 weight, rows not divisible by the
    # tile (exercises masked-tail path and bf16 sublane packing). ---
    k1, k2 = jax.random.split(key)
    xb = jax.random.normal(k1, (3, 37, 256), dtype=jnp.bfloat16)
    wb = (1.0 + 0.01 * jax.random.normal(k2, (256,))).astype(jnp.bfloat16)

    outb = jax.block_until_ready(rmsnorm(xb, wb, eps=1e-6))
    refb = _reference(xb, wb, 1e-6)
    assert outb.shape == refb.shape and outb.dtype == jnp.bfloat16
    assert jnp.allclose(outb.astype(jnp.float32), refb.astype(jnp.float32),
                        atol=2e-2, rtol=2e-2)

    # --- Test 3: f32 weight + bf16 activations with the opt-in downcast flag
    # (keeps bf16-width HBM writes; documented semantics change). ---
    wf = (1.0 + 0.01 * jax.random.normal(k2, (256,))).astype(jnp.float32)
    outc = jax.block_until_ready(
        rmsnorm(xb, wf, eps=1e-6, downcast_weight_to_input_dtype=True))
    refc = _reference(xb, wf.astype(jnp.bfloat16), 1e-6)
    assert outc.shape == refc.shape and outc.dtype == jnp.bfloat16
    assert jnp.allclose(outc.astype(jnp.float32), refc.astype(jnp.float32),
                        atol=2e-2, rtol=2e-2)

    print("KERNEL_OK")
</pallas_src>

<mosaic_0001>
module attributes {stable_mosaic.version = 11 : i64} {
  func.func @_rmsnorm_kernel(%arg0: i32, %arg1: memref<16x32xf32, #tpu.memory_space<vmem>>, %arg2: memref<1x32xf32, #tpu.memory_space<vmem>>, %arg3: memref<16x32xf32, #tpu.memory_space<vmem>>) attributes {dimension_semantics = [#tpu.dimension_semantics<parallel>], iteration_bounds = array<i64: 1>, scalar_prefetch = 0 : i64, scratch_operands = 0 : i64, tpu.core_type = #tpu.core_type<tc>, window_params = [{transform_indices = @transform_0, window_bounds = array<i64: 16, 32>}, {pipeline_mode = #tpu.pipeline_mode<synchronous>, transform_indices = @transform_1, window_bounds = array<i64: 1, 32>}, {transform_indices = @transform_2, window_bounds = array<i64: 16, 32>}]} {
    %c0 = arith.constant 0 : index
    %c0_0 = arith.constant 0 : index
    %0 = vector.load %arg1[%c0, %c0_0] : memref<16x32xf32, #tpu.memory_space<vmem>>, vector<16x32xf32>
    %1 = arith.mulf %0, %0 : vector<16x32xf32>
    %cst = arith.constant dense<0.000000e+00> : vector<16xf32>
    %2 = vector.multi_reduction <add>, %1, %cst [1] : vector<16x32xf32> to vector<16xf32>
    %3 = vector.shape_cast %2 : vector<16xf32> to vector<16x1xf32>
    %cst_1 = arith.constant 3.200000e+01 : f32
    %4 = vector.broadcast %cst_1 : f32 to vector<16x1xf32>
    %5 = arith.divf %3, %4 : vector<16x1xf32>
    %cst_2 = arith.constant 9.99999997E-7 : f32
    %6 = vector.broadcast %cst_2 : f32 to vector<16x1xf32>
    %7 = arith.addf %5, %6 : vector<16x1xf32>
    %8 = math.rsqrt %7 : vector<16x1xf32>
    %9 = vector.broadcast %8 : vector<16x1xf32> to vector<16x32xf32>
    %10 = arith.mulf %0, %9 : vector<16x32xf32>
    %c0_3 = arith.constant 0 : index
    %c0_4 = arith.constant 0 : index
    %11 = vector.load %arg2[%c0_3, %c0_4] : memref<1x32xf32, #tpu.memory_space<vmem>>, vector<1x32xf32>
    %12 = vector.broadcast %11 : vector<1x32xf32> to vector<16x32xf32>
    %13 = arith.mulf %12, %10 : vector<16x32xf32>
    %c0_5 = arith.constant 0 : index
    %c0_6 = arith.constant 0 : index
    %14 = vector.load %arg3[%c0_5, %c0_6] : memref<16x32xf32, #tpu.memory_space<vmem>>, vector<16x32xf32>
    tpu.vector_store %arg3[%c0_5, %c0_6], %13 {strides = array<i32>} : memref<16x32xf32, #tpu.memory_space<vmem>>, vector<16x32xf32>,
    return
  }
  func.func @transform_0(%arg0: i32) -> (i32, i32) {
    %c0_i32 = arith.constant 0 : i32
    %c0_i32_0 = arith.constant 0 : i32
    return %arg0, %c0_i32 : i32, i32
  }
  func.func @transform_1(%arg0: i32) -> (i32, i32) {
    %c0_i32 = arith.constant 0 : i32
    %c0_i32_0 = arith.constant 0 : i32
    %c0_i32_1 = arith.constant 0 : i32
    return %c0_i32, %c0_i32_0 : i32, i32
  }
  func.func @transform_2(%arg0: i32) -> (i32, i32) {
    %c0_i32 = arith.constant 0 : i32
    %c0_i32_0 = arith.constant 0 : i32
    return %arg0, %c0_i32 : i32, i32
  }
}

</mosaic_0001>

<llo_original>
// kernel: tpu_custom_call.1
$region0: #{tpu_custom_call.1}
  #allocation0 [shape = 'u32[]', space=smem, size = 0x4, offset = 0x4, fixed_abs, tag = 'smem constant byte address 0x4 - core index']
  #allocation1 [shape = 'u32[72,128]{1,0:T(1,128)}', space=vmem, size = 0x9000, scoped, tag = 'internal scratch']
  %s0 = inlined_call_operand.hbm [shape: f32[16,32], index: 0, kind: input, shape index: {}]
  %s1 = inlined_call_operand.hbm [shape: f32[1,32], index: 1, kind: input, shape index: {}]
  %s2 = inlined_call_operand.hbm [shape: f32[16,32], index: 2, kind: output, shape index: {}]
  %s3 = sld [smem:[#allocation0]]
  $region26: #{tpu_custom_call.1} parent=0
    _
  %s5 = ssub.s32 1, %s3
  %s6 = scalar_select 0, %s5, %s3
  $region1: #{tpu_custom_call.1} parent=0
    #allocation2 [shape = 'u8[8192]{0}', space=vmem, size = 0x2000, scoped, tag = 'input window, operand 0, single buffered']
    #allocation3 [shape = 's32[1]{0}', space=sflag, size = 0x4, scoped, tag = 'scoped memory for tpu_custom_call.1']
    #allocation4 [shape = 's32[1]{0}', space=sflag, size = 0x4, scoped, tag = 'scoped memory for tpu_custom_call.1']
    #allocation5 [shape = 'u8[512]{0}', space=vmem, size = 0x400, scoped, tag = 'input window, operand 1, single buffered']
    #allocation6 [shape = 's32[1]{0}', space=sflag, size = 0x4, scoped, tag = 'scoped memory for tpu_custom_call.1']
    #allocation7 [shape = 'u8[8192]{0}', space=vmem, size = 0x2000, scoped, tag = 'output window, operand 0, single buffered']
    %7 = vsyncpa [#allocation3], 0
    %8 = vsyncpa [#allocation6], 0
    %9 = vsyncpa [#allocation4], 0
    // Predicated region
    $region2: #{tpu_custom_call.1} parent=1 // pred_check
      _
    $region3: #{tpu_custom_call.1} parent=1 // pred_check_branch
      %11 = sbr.rel (0) target = $region5
    $region4: #{tpu_custom_call.1} parent=1 // pred_region
      %13 = vsyncadd [#allocation3], 0
      %s14 = sshll.u32 %s0, 4
      %s15 = int_to_ptr.hbm [resolvable:$true] %s14
      %s16 = sshll.u32 [#allocation2], 4
      %s17 = int_to_ptr.vmem [resolvable:$true] %s16
      %22 = dma.hbm_to_vmem [thread:$0]  %s15, 256, %s17, [#allocation3], 128, 128, 8
    $region5: #{tpu_custom_call.1} parent=1 // pred_fallthru
      _
    // Predicated region
    $region6: #{tpu_custom_call.1} parent=1 // pred_check
      _
    $region7: #{tpu_custom_call.1} parent=1 // pred_check_branch
      %24 = sbr.rel (0) target = $region9
    $region8: #{tpu_custom_call.1} parent=1 // pred_region
      %26 = vsyncadd [#allocation6], 0
      %s28 = sshll.u32 %s1, 4
      %s29 = int_to_ptr.hbm [resolvable:$true] %s28
      %s30 = sshll.u32 [#allocation5], 4
      %s31 = int_to_ptr.vmem [resolvable:$true] %s30
      %33 = dma.hbm_to_vmem [thread:$0]  %s29, 16, %s31, [#allocation6]
    $region9: #{tpu_custom_call.1} parent=1 // pred_fallthru
      _
    // Predicated region
    $region10: #{tpu_custom_call.1} parent=1 // pred_check
      _
    $region11: #{tpu_custom_call.1} parent=1 // pred_check_branch
      %35 = sbr.rel (0) target = $region13
    $region12: #{tpu_custom_call.1} parent=1 // pred_region
      %37 = dma.done [#allocation3], 256
    $region13: #{tpu_custom_call.1} parent=1 // pred_fallthru
      _
    // Predicated region
    $region14: #{tpu_custom_call.1} parent=1 // pred_check
      _
    $region15: #{tpu_custom_call.1} parent=1 // pred_check_branch
      %39 = sbr.rel (0) target = $region17
    $region16: #{tpu_custom_call.1} parent=1 // pred_region
      %41 = dma.done [#allocation6], 16
    $region17: #{tpu_custom_call.1} parent=1 // pred_fallthru
      _
    %v42 = vld [vmem:[#allocation2] sm:$0xff]
    %v43 = vld [vmem:[#allocation2 + $0x8] sm:$0xff]
    %v44 = vmul.f32 %v42, %v42
    %v45 = vmul.f32 %v43, %v43
    %vm46 = vcmask 261120
    %v47 = vsel %vm46, %v44, 0.0
    %48 = vadd.xlane.f32.xlu0 %v47
    %v49 = vpop.xlane.xlu0 %48
    %v50 = vsel %vm46, %v45, 0.0
    %51 = vadd.xlane.f32.xlu0 %v50
    %v52 = vpop.xlane.xlu0 %51
    %v53 = vrcp.pop 32.0
    %v54 = vmul.f32 32.0, %v53
    %v55 = vsub.f32 1.0, %v54
    %v56 = vmul.f32 %v53, %v55
    %v57 = vadd.f32 %v53, %v56
    %vm58 = vweird.f32 %v53
    %v59 = vsel %vm58, %v53, %v57
    %v60 = vmul.f32 %v49, %v59
    %v61 = vmul.f32 %v52, %v59
    %v62 = vadd.f32 %v60, 1e-06
    %v63 = vadd.f32 %v61, 1e-06
    %v64 = vrsqrt.pop %v62
    %v65 = vmul.f32 %v64, %v62
    %v66 = vmul.f32 %v65, %v64
    %v67 = vmul.f32 0.5, %v66
    %v68 = vsub.f32 1.5, %v67
    %v69 = vmul.f32 %v64, %v68
    %vm70 = vweird.f32 %v62
    %vm71 = vweird.f32 %v64
    %vm72 = vmor %vm70, %vm71
    %v73 = vsel %vm72, %v64, %v69
    %v74 = vrsqrt.pop %v63
    %v75 = vmul.f32 %v74, %v63
    %v76 = vmul.f32 %v75, %v74
    %v77 = vmul.f32 0.5, %v76
    %v78 = vsub.f32 1.5, %v77
    %v79 = vmul.f32 %v74, %v78
    %vm80 = vweird.f32 %v63
    %vm81 = vweird.f32 %v74
    %vm82 = vmor %vm80, %vm81
    %v83 = vsel %vm82, %v74, %v79
    %v84 = vmul.f32 %v42, %v73
    %v85 = vmul.f32 %v43, %v83
    %v86 = vld [vmem:[#allocation5] sm:$0x1]
    %v88 = vperm.slane %v86, 0
    %v90 = vmul.f32 %v88, %v84
    %v91 = vmul.f32 %v88, %v85
    %92 = vst.msk [vmem:[#allocation7] sm:$0xff] %vm46, %v90
    %93 = vst.msk [vmem:[#allocation7 + $0x8] sm:$0xff] %vm46, %v91
    // Predicated region
    $region18: #{tpu_custom_call.1} parent=1 // pred_check
      _
    $region19: #{tpu_custom_call.1} parent=1 // pred_check_branch
      %95 = sbr.rel (0) target = $region21
    $region20: #{tpu_custom_call.1} parent=1 // pred_region
      %97 = vsyncadd [#allocation4], 0
      %s98 = sshll.u32 [#allocation7], 4
      %s99 = int_to_ptr.vmem [resolvable:$true] %s98
      %s100 = sshll.u32 %s2, 4
      %s101 = int_to_ptr.hbm [resolvable:$true] %s100
      %106 = dma.vmem_to_hbm [thread:$0]  %s99, 256, %s101, [#allocation4], 128, 128, 8
    $region21: #{tpu_custom_call.1} parent=1 // pred_fallthru
      _
    // Predicated region
    $region22: #{tpu_custom_call.1} parent=1 // pred_check
      _
    $region23: #{tpu_custom_call.1} parent=1 // pred_check_branch
      %108 = sbr.rel (0) target = $region25
    $region24: #{tpu_custom_call.1} parent=1 // pred_region
      %110 = dma.done [#allocation4], 256
    $region25: #{tpu_custom_call.1} parent=1 // pred_fallthru
      _
    %111 = vsyncpa [#allocation3], 1
    %112 = vsyncpa [#allocation6], 1
    %113 = vsyncpa [#allocation4], 1

</llo_original>
